<compile_context>
chip_gen: v5e
topology: v5e:2x2
jax: 0.10.0
libtpu: 0.0.40
codegen_flags: <defaults>
</compile_context>

<pallas_src>
import functools
import math

import jax
import jax.numpy as jnp
from jax import lax
from jax.experimental import pallas as pl
from jax.experimental.pallas import tpu as pltpu


DEFAULT_LN_EPS = 1e-12  # BERT config.layer_norm_eps default


def _round_up(x, m):
    return ((x + m - 1) // m) * m


def _vmem_cap_bytes():
    """Physical VMEM per TensorCore; conservative 64 MiB (v7x) fallback."""
    try:
        return int(pltpu.get_tpu_info().vmem_capacity_bytes)
    except Exception:
        return 64 * 1024 * 1024


def _bert_self_output_kernel(hs_ref, res_ref, w_ref, b_ref, g_ref, beta_ref,
                             o_ref, *, eps, compute_dtype):
    """o = LayerNorm(hs @ w + b + res) for one row tile.

    hs_ref/res_ref/o_ref: (TM, H); w_ref: (H, H) [in, out] in compute_dtype;
    b/g/beta: (1, H). `eps` / `compute_dtype` are static Python values.
    """
    # Dense: MXU matmul with compute_dtype operands, f32 accumulation.
    hs = hs_ref[...].astype(compute_dtype)
    h = jnp.dot(hs, w_ref[...], preferred_element_type=jnp.float32)
    # Bias + residual (dropout is identity in eval mode).
    h = h + b_ref[...].astype(jnp.float32) + res_ref[...].astype(jnp.float32)

    # Two-pass LayerNorm statistics (biased variance, eps inside the sqrt).
    mean = jnp.mean(h, axis=-1, keepdims=True)
    centered = h - mean
    var = jnp.mean(centered * centered, axis=-1, keepdims=True)

    y = centered * lax.rsqrt(var + eps)
    y = y * g_ref[...].astype(jnp.float32) + beta_ref[...].astype(jnp.float32)
    o_ref[...] = y.astype(o_ref.dtype)


def _resident_spec(shape):
    # Constant index_map -> block stays VMEM-resident across all grid steps;
    # Buffered(1) avoids allocating a pointless second (double) buffer for it.
    return pl.BlockSpec(shape, lambda i: (0,) * len(shape),
                        pipeline_mode=pl.Buffered(1))


def _bert_self_output_2d(hs2d, res2d, w, b, gamma, beta, *, eps,
                         compute_dtype, tm):
    """hs2d/res2d: [rows, H]; w: [H, H] (pre-transposed [in, out]); b/gamma/beta: [1, H]."""
    rows, hidden = hs2d.shape
    out_dtype = hs2d.dtype
    act_itemsize = jnp.dtype(out_dtype).itemsize
    comp_itemsize = jnp.dtype(compute_dtype).itemsize
    param_itemsize = jnp.dtype(b.dtype).itemsize

    # Sublane packing granularity for the streamed activation dtype
    # (f32 -> 8 rows, bf16 -> 16, int8/fp8 -> 32).
    align = max(8, 32 // act_itemsize)
    tm = max(align, _round_up(tm, align))

    # Keep the resident weight in the MXU compute dtype (halves VMEM for bf16).
    w_c = w.astype(compute_dtype)

    # Row tile selection: biggest tile <= tm, but keep >= 2 grid steps whenever
    # rows allows it so the "parallel" axis can shard across v7x's 2 TensorCores.
    if rows <= align:
        blk_m = rows                       # single full-extent (possibly ragged) tile
    else:
        blk_m = min(tm, max(align, _round_up(pl.cdiv(rows, 2), align)))
    grid = (pl.cdiv(rows, blk_m),)

    # VMEM budget: double-buffered streamed tiles + single-buffered resident
    # params + the f32 intermediates (h, centered, y) the compiler materializes.
    act_tile_bytes = blk_m * hidden * act_itemsize
    resident_bytes = hidden * hidden * comp_itemsize + 3 * hidden * param_itemsize
    f32_scratch_bytes = 4 * blk_m * hidden * 4
    vmem_est = 3 * 2 * act_tile_bytes + resident_bytes + f32_scratch_bytes
    vmem_cap = _vmem_cap_bytes()
    vmem_limit = int(min(max(vmem_est + vmem_est // 2, 16 * 1024 * 1024),
                         (vmem_cap * 7) // 8))

    cost = pl.CostEstimate(
        flops=2 * rows * hidden * hidden + 10 * rows * hidden,
        transcendentals=rows,  # one rsqrt per row
        bytes_accessed=(3 * rows * hidden * act_itemsize
                        + hidden * hidden * comp_itemsize
                        + 3 * hidden * param_itemsize),
    )

    kernel = functools.partial(_bert_self_output_kernel,
                               eps=eps, compute_dtype=compute_dtype)

    return pl.pallas_call(
        kernel,
        out_shape=jax.ShapeDtypeStruct((rows, hidden), out_dtype),
        grid_spec=pltpu.PrefetchScalarGridSpec(
            num_scalar_prefetch=0,
            grid=grid,
            in_specs=[
                pl.BlockSpec((blk_m, hidden), lambda i: (i, 0)),   # hidden_states tile
                pl.BlockSpec((blk_m, hidden), lambda i: (i, 0)),   # residual tile
                _resident_spec((hidden, hidden)),                  # dense weight (resident)
                _resident_spec((1, hidden)),                       # dense bias (resident)
                _resident_spec((1, hidden)),                       # LN gamma (resident)
                _resident_spec((1, hidden)),                       # LN beta (resident)
            ],
            out_specs=pl.BlockSpec((blk_m, hidden), lambda i: (i, 0)),
        ),
        compiler_params=pltpu.CompilerParams(
            dimension_semantics=("parallel",),
            vmem_limit_bytes=vmem_limit,
        ),
        cost_estimate=cost,
    )(hs2d, res2d, w_c, b, gamma, beta)


def init_bert_self_output_params(key, hidden_size, dtype=jnp.float32):
    """Matches nn.Linear(hidden, hidden) + BertLayerNorm(hidden) parameter shapes."""
    k_w, k_b = jax.random.split(key)
    bound = 1.0 / math.sqrt(hidden_size)
    # nn.Linear weight is [out, in]; store pre-transposed [in, out] for the kernel.
    w = jax.random.uniform(k_w, (hidden_size, hidden_size), dtype=dtype,
                           minval=-bound, maxval=bound)
    b = jax.random.uniform(k_b, (1, hidden_size), dtype=dtype,
                           minval=-bound, maxval=bound)
    return {
        "dense_w": w,
        "dense_b": b,
        "ln_gamma": jnp.ones((1, hidden_size), dtype=dtype),
        "ln_beta": jnp.zeros((1, hidden_size), dtype=dtype),
    }


@functools.partial(jax.jit, static_argnames=("eps", "compute_dtype", "tm"))
def bert_self_output_forward(params, hidden_states, input_tensor, *,
                             eps=DEFAULT_LN_EPS,
                             compute_dtype=jnp.bfloat16,
                             tm=512):
    """hidden_states, input_tensor: [..., H] -> [..., H]."""
    orig_shape = hidden_states.shape
    hidden = orig_shape[-1]
    hs2d = hidden_states.reshape(-1, hidden)
    res2d = input_tensor.reshape(-1, hidden)
    out2d = _bert_self_output_2d(
        hs2d, res2d,
        params["dense_w"], params["dense_b"],
        params["ln_gamma"], params["ln_beta"],
        eps=eps, compute_dtype=compute_dtype, tm=tm,
    )
    return out2d.reshape(orig_shape)


def _reference_forward(params, hidden_states, input_tensor, eps=DEFAULT_LN_EPS):
    """Pure-JAX f32 reference (mirrors the PyTorch module in eval mode)."""
    h = hidden_states @ params["dense_w"] + params["dense_b"]
    h = h + input_tensor
    u = jnp.mean(h, axis=-1, keepdims=True)
    s = jnp.mean(jnp.square(h - u), axis=-1, keepdims=True)
    h = (h - u) / jnp.sqrt(s + eps)
    return params["ln_gamma"] * h + params["ln_beta"]


if __name__ == "__main__":
    key = jax.random.PRNGKey(0)
    k_param, k_hs, k_res = jax.random.split(key, 3)

    # Small shapes: batch=2, seq=8, hidden=128 (lane-dense feature dim).
    batch, seq, hidden = 2, 8, 128
    hidden_states = jax.random.normal(k_hs, (batch, seq, hidden), dtype=jnp.float32)
    input_tensor = jax.random.normal(k_res, (batch, seq, hidden), dtype=jnp.float32)
    params = init_bert_self_output_params(k_param, hidden, dtype=jnp.float32)

    ref = _reference_forward(params, hidden_states, input_tensor)

    # Default bf16-operand MXU path (f32 accumulation + f32 LayerNorm math).
    out_bf16 = jax.block_until_ready(
        bert_self_output_forward(params, hidden_states, input_tensor))
    assert out_bf16.shape == (batch, seq, hidden), out_bf16.shape
    assert jnp.allclose(out_bf16, ref, atol=2e-2, rtol=2e-2), \
        "bf16-compute kernel mismatch vs reference"

    # Full-f32 compute path, tight tolerance.
    out_f32 = jax.block_until_ready(
        bert_self_output_forward(params, hidden_states, input_tensor,
                                 compute_dtype=jnp.float32))
    assert out_f32.shape == (batch, seq, hidden), out_f32.shape
    assert jnp.allclose(out_f32, ref, atol=1e-4, rtol=1e-4), \
        "f32-compute kernel mismatch vs reference"

    print("KERNEL_OK")
</pallas_src>

<mosaic_0001>
module attributes {stable_mosaic.version = 11 : i64} {
  func.func @_bert_self_output_kernel(%arg0: i32, %arg1: memref<8x128xf32, #tpu.memory_space<vmem>>, %arg2: memref<8x128xf32, #tpu.memory_space<vmem>>, %arg3: memref<128x128xbf16, #tpu.memory_space<vmem>>, %arg4: memref<1x128xf32, #tpu.memory_space<vmem>>, %arg5: memref<1x128xf32, #tpu.memory_space<vmem>>, %arg6: memref<1x128xf32, #tpu.memory_space<vmem>>, %arg7: memref<8x128xf32, #tpu.memory_space<vmem>>) attributes {dimension_semantics = [#tpu.dimension_semantics<parallel>], iteration_bounds = array<i64: 2>, scalar_prefetch = 0 : i64, scratch_operands = 0 : i64, tpu.core_type = #tpu.core_type<tc>, window_params = [{transform_indices = @transform_0, window_bounds = array<i64: 8, 128>}, {transform_indices = @transform_1, window_bounds = array<i64: 8, 128>}, {pipeline_mode = #tpu.pipeline_mode<synchronous>, transform_indices = @transform_2, window_bounds = array<i64: 128, 128>}, {pipeline_mode = #tpu.pipeline_mode<synchronous>, transform_indices = @transform_3, window_bounds = array<i64: 1, 128>}, {pipeline_mode = #tpu.pipeline_mode<synchronous>, transform_indices = @transform_4, window_bounds = array<i64: 1, 128>}, {pipeline_mode = #tpu.pipeline_mode<synchronous>, transform_indices = @transform_5, window_bounds = array<i64: 1, 128>}, {transform_indices = @transform_6, window_bounds = array<i64: 8, 128>}]} {
    %c0 = arith.constant 0 : index
    %c0_0 = arith.constant 0 : index
    %0 = vector.load %arg1[%c0, %c0_0] : memref<8x128xf32, #tpu.memory_space<vmem>>, vector<8x128xf32>
    %1 = arith.truncf %0 : vector<8x128xf32> to vector<8x128xbf16>
    %c0_1 = arith.constant 0 : index
    %c0_2 = arith.constant 0 : index
    %2 = vector.load %arg3[%c0_1, %c0_2] : memref<128x128xbf16, #tpu.memory_space<vmem>>, vector<128x128xbf16>
    %cst = arith.constant dense<0.000000e+00> : vector<8x128xf32>
    %3 = tpu.matmul %1, %2, %cst {dimension_numbers = #tpu.dot_dimension_numbers<[1], [0], [0], [1], [0, 0, 1, 1], [], []>} : vector<8x128xbf16>, vector<128x128xbf16>, vector<8x128xf32> -> vector<8x128xf32>
    %c0_3 = arith.constant 0 : index
    %c0_4 = arith.constant 0 : index
    %4 = vector.load %arg4[%c0_3, %c0_4] : memref<1x128xf32, #tpu.memory_space<vmem>>, vector<1x128xf32>
    %5 = vector.broadcast %4 : vector<1x128xf32> to vector<8x128xf32>
    %6 = arith.addf %3, %5 : vector<8x128xf32>
    %c0_5 = arith.constant 0 : index
    %c0_6 = arith.constant 0 : index
    %7 = vector.load %arg2[%c0_5, %c0_6] : memref<8x128xf32, #tpu.memory_space<vmem>>, vector<8x128xf32>
    %8 = arith.addf %6, %7 : vector<8x128xf32>
    %cst_7 = arith.constant dense<0.000000e+00> : vector<8xf32>
    %9 = vector.multi_reduction <add>, %8, %cst_7 [1] : vector<8x128xf32> to vector<8xf32>
    %10 = vector.shape_cast %9 : vector<8xf32> to vector<8x1xf32>
    %cst_8 = arith.constant 1.280000e+02 : f32
    %11 = vector.broadcast %cst_8 : f32 to vector<8x1xf32>
    %12 = arith.divf %10, %11 : vector<8x1xf32>
    %13 = vector.broadcast %12 : vector<8x1xf32> to vector<8x128xf32>
    %14 = arith.subf %8, %13 : vector<8x128xf32>
    %15 = arith.mulf %14, %14 : vector<8x128xf32>
    %cst_9 = arith.constant dense<0.000000e+00> : vector<8xf32>
    %16 = vector.multi_reduction <add>, %15, %cst_9 [1] : vector<8x128xf32> to vector<8xf32>
    %17 = vector.shape_cast %16 : vector<8xf32> to vector<8x1xf32>
    %cst_10 = arith.constant 1.280000e+02 : f32
    %18 = vector.broadcast %cst_10 : f32 to vector<8x1xf32>
    %19 = arith.divf %17, %18 : vector<8x1xf32>
    %cst_11 = arith.constant 9.99999996E-13 : f32
    %20 = vector.broadcast %cst_11 : f32 to vector<8x1xf32>
    %21 = arith.addf %19, %20 : vector<8x1xf32>
    %22 = math.rsqrt %21 : vector<8x1xf32>
    %23 = vector.broadcast %22 : vector<8x1xf32> to vector<8x128xf32>
    %24 = arith.mulf %14, %23 : vector<8x128xf32>
    %c0_12 = arith.constant 0 : index
    %c0_13 = arith.constant 0 : index
    %25 = vector.load %arg5[%c0_12, %c0_13] : memref<1x128xf32, #tpu.memory_space<vmem>>, vector<1x128xf32>
    %26 = vector.broadcast %25 : vector<1x128xf32> to vector<8x128xf32>
    %27 = arith.mulf %24, %26 : vector<8x128xf32>
    %c0_14 = arith.constant 0 : index
    %c0_15 = arith.constant 0 : index
    %28 = vector.load %arg6[%c0_14, %c0_15] : memref<1x128xf32, #tpu.memory_space<vmem>>, vector<1x128xf32>
    %29 = vector.broadcast %28 : vector<1x128xf32> to vector<8x128xf32>
    %30 = arith.addf %27, %29 : vector<8x128xf32>
    %c0_16 = arith.constant 0 : index
    %c0_17 = arith.constant 0 : index
    %31 = vector.load %arg7[%c0_16, %c0_17] : memref<8x128xf32, #tpu.memory_space<vmem>>, vector<8x128xf32>
    tpu.vector_store %arg7[%c0_16, %c0_17], %30 {strides = array<i32>} : memref<8x128xf32, #tpu.memory_space<vmem>>, vector<8x128xf32>,
    return
  }
  func.func @transform_0(%arg0: i32) -> (i32, i32) {
    %c0_i32 = arith.constant 0 : i32
    %c0_i32_0 = arith.constant 0 : i32
    return %arg0, %c0_i32 : i32, i32
  }
  func.func @transform_1(%arg0: i32) -> (i32, i32) {
    %c0_i32 = arith.constant 0 : i32
    %c0_i32_0 = arith.constant 0 : i32
    return %arg0, %c0_i32 : i32, i32
  }
  func.func @transform_2(%arg0: i32) -> (i32, i32) {
    %c0_i32 = arith.constant 0 : i32
    %c0_i32_0 = arith.constant 0 : i32
    %c0_i32_1 = arith.constant 0 : i32
    return %c0_i32, %c0_i32_0 : i32, i32
  }
  func.func @transform_3(%arg0: i32) -> (i32, i32) {
    %c0_i32 = arith.constant 0 : i32
    %c0_i32_0 = arith.constant 0 : i32
    %c0_i32_1 = arith.constant 0 : i32
    return %c0_i32, %c0_i32_0 : i32, i32
  }
  func.func @transform_4(%arg0: i32) -> (i32, i32) {
    %c0_i32 = arith.constant 0 : i32
    %c0_i32_0 = arith.constant 0 : i32
    %c0_i32_1 = arith.constant 0 : i32
    return %c0_i32, %c0_i32_0 : i32, i32
  }
  func.func @transform_5(%arg0: i32) -> (i32, i32) {
    %c0_i32 = arith.constant 0 : i32
    %c0_i32_0 = arith.constant 0 : i32
    %c0_i32_1 = arith.constant 0 : i32
    return %c0_i32, %c0_i32_0 : i32, i32
  }
  func.func @transform_6(%arg0: i32) -> (i32, i32) {
    %c0_i32 = arith.constant 0 : i32
    %c0_i32_0 = arith.constant 0 : i32
    return %arg0, %c0_i32 : i32, i32
  }
}

</mosaic_0001>

<llo_original>
// kernel: bert_self_output_forward.1
$region0: #{bert_self_output_forward.1}
  #allocation0 [shape = 'u32[]', space=smem, size = 0x4, offset = 0x4, fixed_abs, tag = 'smem constant byte address 0x4 - core index']
  #allocation1 [shape = 'u32[72,128]{1,0:T(1,128)}', space=vmem, size = 0x9000, scoped, tag = 'internal scratch']
  %s0 = inlined_call_operand.vmem [shape: f32[16,128], index: 0, kind: input, shape index: {}]
  %s1 = inlined_call_operand.vmem [shape: f32[16,128], index: 1, kind: input, shape index: {}]
  %s2 = inlined_call_operand.vmem [shape: bf16[128,128], index: 2, kind: input, shape index: {}]
  %s3 = inlined_call_operand.vmem [shape: f32[1,128], index: 3, kind: input, shape index: {}]
  %s4 = inlined_call_operand.vmem [shape: f32[1,128], index: 4, kind: input, shape index: {}]
  %s5 = inlined_call_operand.vmem [shape: f32[1,128], index: 5, kind: input, shape index: {}]
  %s6 = inlined_call_operand.hbm [shape: f32[16,128], index: 6, kind: output, shape index: {}]
  %s7 = sld [smem:[#allocation0]]
  $region57: #{bert_self_output_forward.1} parent=0
    _
  %s9 = ssub.s32 1, %s7
  %s10 = scalar_select 0, %s9, %s7
  $region1: #{bert_self_output_forward.1} parent=0
    #allocation2 [shape = 'u8[8192]{0}', space=vmem, size = 0x2000, scoped, tag = 'output window, operand 0']
    #allocation3 [shape = 's32[2]{0}', space=sflag, size = 0x8, scoped, tag = 'scoped memory for bert_self_output_forward.1']
    %11 = vsyncpa [#allocation3], 0
    %s12 = scalar_lea.sflag [#allocation3], 1
    %13 = vsyncpa %s12, 0
    loop: start=0, step=1, limit=4
    $region2: #{bert_self_output_forward.1} parent=1 // loop_pre_header
      _
    $region3: #{bert_self_output_forward.1} parent=1 // loop_header
      %s15 = sphi 0, %s19
      %p16 = scmp.ge.s32.totalorder %s15, 4
      %s25 = sphi 0, %s27
      %s28 = sphi 0, %s25
      %s29 = sphi 0, %s28
      %s45 = sphi 0, %s29
      %s51 = sphi 0, %s53
      %s54 = sphi 0, %s51
      %s55 = sphi 0, %s54
      %s71 = sphi 0, %s55
      %s75 = sphi 0, %s75
      %s77 = sphi 0, %s75
      %s78 = sphi 0, %s77
      %s92 = sphi 0, %s78
      %s96 = sphi 0, %s96
      %s98 = sphi 0, %s96
      %s99 = sphi 0, %s98
      %s113 = sphi 0, %s99
      %s117 = sphi 0, %s117
      %s119 = sphi 0, %s117
      %s120 = sphi 0, %s119
      %s134 = sphi 0, %s120
      %s138 = sphi 0, %s138
      %s140 = sphi 0, %s138
      %s141 = sphi 0, %s140
      %s155 = sphi 0, %s141
      %s161 = sphi 0, %s163
      %s164 = sphi 0, %s161
      %s165 = sphi 0, %s164
      %s181 = sphi 0, %s165
    $region4: #{bert_self_output_forward.1} parent=1 // loop_header_branch
      %18 = sbr.rel (%p16) target = $region8
    $region5: #{bert_self_output_forward.1} parent=1 // loop_body
      %s20 = ssub.s32 %s15, 1
      %s21 = ssub.s32 %s15, 2
      %s22 = sadd.s32 %s15, 1
      %s23 = ssub.s32 %s15, %s22
      %p24 = scmp.eq.s32.totalorder %s23, 0
      %s26 = sadd.s32 %s25, 1
      %s27 = scalar_select %p24, %s25, %s26
      %p30 = pneg %p24
      %p31 = scmp.eq.s32.totalorder %s15, 1
      %p32 = por %p30, %p31
      %p33 = scmp.ne.s32.totalorder %s25, %s28
      %p34 = scmp.eq.s32.totalorder %s15, 0
      %p35 = por %p33, %p34
      %p36 = scmp.ne.s32.totalorder %s25, %s28
      %p37 = scmp.eq.s32.totalorder %s20, 1
      %p38 = por %p36, %p37
      %p39 = scmp.ne.s32.totalorder %s28, %s29
      %p40 = scmp.eq.s32.totalorder %s20, 0
      %p41 = por %p39, %p40
      %p42 = scmp.ne.s32.totalorder %s28, %s29
      %p43 = scmp.eq.s32.totalorder %s21, 1
      %p44 = por %p42, %p43
      %p46 = scmp.ne.s32.totalorder %s29, %s45
      %p47 = scmp.eq.s32.totalorder %s21, 0
      %p48 = por %p46, %p47
      %s49 = ssub.s32 %s15, %s22
      %p50 = scmp.eq.s32.totalorder %s49, 0
      %s52 = sadd.s32 %s51, 1
      %s53 = scalar_select %p50, %s51, %s52
      %p56 = pneg %p50
      %p57 = scmp.eq.s32.totalorder %s15, 1
      %p58 = por %p56, %p57
      %p59 = scmp.ne.s32.totalorder %s51, %s54
      %p60 = scmp.eq.s32.totalorder %s15, 0
      %p61 = por %p59, %p60
      %p62 = scmp.ne.s32.totalorder %s51, %s54
      %p63 = scmp.eq.s32.totalorder %s20, 1
      %p64 = por %p62, %p63
      %p65 = scmp.ne.s32.totalorder %s54, %s55
      %p66 = scmp.eq.s32.totalorder %s20, 0
      %p67 = por %p65, %p66
      %p68 = scmp.ne.s32.totalorder %s54, %s55
      %p69 = scmp.eq.s32.totalorder %s21, 1
      %p70 = por %p68, %p69
      %p72 = scmp.ne.s32.totalorder %s55, %s71
      %p73 = scmp.eq.s32.totalorder %s21, 0
      %p74 = por %p72, %p73
      %s76 = sadd.s32 %s75, 1
      %p79 = scmp.eq.s32.totalorder %s15, 1
      %p80 = scmp.ne.s32.totalorder %s75, %s77
      %p81 = scmp.eq.s32.totalorder %s15, 0
      %p82 = por %p80, %p81
      %p83 = scmp.ne.s32.totalorder %s75, %s77
      %p84 = scmp.eq.s32.totalorder %s20, 1
      %p85 = por %p83, %p84
      %p86 = scmp.ne.s32.totalorder %s77, %s78
      %p87 = scmp.eq.s32.totalorder %s20, 0
      %p88 = por %p86, %p87
      %p89 = scmp.ne.s32.totalorder %s77, %s78
      %p90 = scmp.eq.s32.totalorder %s21, 1
      %p91 = por %p89, %p90
      %p93 = scmp.ne.s32.totalorder %s78, %s92
      %p94 = scmp.eq.s32.totalorder %s21, 0
      %p95 = por %p93, %p94
      %s97 = sadd.s32 %s96, 1
      %p100 = scmp.eq.s32.totalorder %s15, 1
      %p101 = scmp.ne.s32.totalorder %s96, %s98
      %p102 = scmp.eq.s32.totalorder %s15, 0
      %p103 = por %p101, %p102
      %p104 = scmp.ne.s32.totalorder %s96, %s98
      %p105 = scmp.eq.s32.totalorder %s20, 1
      %p106 = por %p104, %p105
      %p107 = scmp.ne.s32.totalorder %s98, %s99
      %p108 = scmp.eq.s32.totalorder %s20, 0
      %p109 = por %p107, %p108
      %p110 = scmp.ne.s32.totalorder %s98, %s99
      %p111 = scmp.eq.s32.totalorder %s21, 1
      %p112 = por %p110, %p111
      %p114 = scmp.ne.s32.totalorder %s99, %s113
      %p115 = scmp.eq.s32.totalorder %s21, 0
      %p116 = por %p114, %p115
      %s118 = sadd.s32 %s117, 1
      %p121 = scmp.eq.s32.totalorder %s15, 1
      %p122 = scmp.ne.s32.totalorder %s117, %s119
      %p123 = scmp.eq.s32.totalorder %s15, 0
      %p124 = por %p122, %p123
      %p125 = scmp.ne.s32.totalorder %s117, %s119
      %p126 = scmp.eq.s32.totalorder %s20, 1
      %p127 = por %p125, %p126
      %p128 = scmp.ne.s32.totalorder %s119, %s120
      %p129 = scmp.eq.s32.totalorder %s20, 0
      %p130 = por %p128, %p129
      %p131 = scmp.ne.s32.totalorder %s119, %s120
      %p132 = scmp.eq.s32.totalorder %s21, 1
      %p133 = por %p131, %p132
      %p135 = scmp.ne.s32.totalorder %s120, %s134
      %p136 = scmp.eq.s32.totalorder %s21, 0
      %p137 = por %p135, %p136
      %s139 = sadd.s32 %s138, 1
      %p142 = scmp.eq.s32.totalorder %s15, 1
      %p143 = scmp.ne.s32.totalorder %s138, %s140
      %p144 = scmp.eq.s32.totalorder %s15, 0
      %p145 = por %p143, %p144
      %p146 = scmp.ne.s32.totalorder %s138, %s140
      %p147 = scmp.eq.s32.totalorder %s20, 1
      %p148 = por %p146, %p147
      %p149 = scmp.ne.s32.totalorder %s140, %s141
      %p150 = scmp.eq.s32.totalorder %s20, 0
      %p151 = por %p149, %p150
      %p152 = scmp.ne.s32.totalorder %s140, %s141
      %p153 = scmp.eq.s32.totalorder %s21, 1
      %p154 = por %p152, %p153
      %p156 = scmp.ne.s32.totalorder %s141, %s155
      %p157 = scmp.eq.s32.totalorder %s21, 0
      %p158 = por %p156, %p157
      %s159 = ssub.s32 %s15, %s22
      %p160 = scmp.eq.s32.totalorder %s159, 0
      %s162 = sadd.s32 %s161, 1
      %s163 = scalar_select %p160, %s161, %s162
      %p166 = pneg %p160
      %p167 = scmp.eq.s32.totalorder %s15, 1
      %p168 = por %p166, %p167
      %p169 = scmp.ne.s32.totalorder %s161, %s164
      %p170 = scmp.eq.s32.totalorder %s15, 0
      %p171 = por %p169, %p170
      %p172 = scmp.ne.s32.totalorder %s161, %s164
      %p173 = scmp.eq.s32.totalorder %s20, 1
      %p174 = por %p172, %p173
      %p175 = scmp.ne.s32.totalorder %s164, %s165
      %p176 = scmp.eq.s32.totalorder %s20, 0
      %p177 = por %p175, %p176
      %p178 = scmp.ne.s32.totalorder %s164, %s165
      %p179 = scmp.eq.s32.totalorder %s21, 1
      %p180 = por %p178, %p179
      %p182 = scmp.ne.s32.totalorder %s165, %s181
      %p183 = scmp.eq.s32.totalorder %s21, 0
      %p184 = por %p182, %p183
      %p185 = scmp.le.s32.totalorder 1, %s15
      %p186 = scmp.lt.s32.totalorder %s15, 3
      %p187 = pnand %p185, %p186
      %p188 = pneg %p187
      // Predicated region
      $region9: #{bert_self_output_forward.1} parent=5 // pred_check
        _
      $region10: #{bert_self_output_forward.1} parent=5 // pred_check_branch
        %190 = sbr.rel (%p187) target = $region12
      $region11: #{bert_self_output_forward.1} parent=5 // pred_region
        %s191 = ssub.s32 %s15, 1
        // Predicated region
        $region13: #{bert_self_output_forward.1} parent=11 // pred_check
          %p192 = pneg %p88
        $region14: #{bert_self_output_forward.1} parent=11 // pred_check_branch
          %194 = sbr.rel (%p192) target = $region16
        $region15: #{bert_self_output_forward.1} parent=11 // pred_region
          _
        $region16: #{bert_self_output_forward.1} parent=11 // pred_fallthru
          _
        // Predicated region
        $region17: #{bert_self_output_forward.1} parent=11 // pred_check
          %p195 = pneg %p109
        $region18: #{bert_self_output_forward.1} parent=11 // pred_check_branch
          %197 = sbr.rel (%p195) target = $region20
        $region19: #{bert_self_output_forward.1} parent=11 // pred_region
          _
        $region20: #{bert_self_output_forward.1} parent=11 // pred_fallthru
          _
        // Predicated region
        $region21: #{bert_self_output_forward.1} parent=11 // pred_check
          %p198 = pneg %p130
        $region22: #{bert_self_output_forward.1} parent=11 // pred_check_branch
          %200 = sbr.rel (%p198) target = $region24
        $region23: #{bert_self_output_forward.1} parent=11 // pred_region
          _
        $region24: #{bert_self_output_forward.1} parent=11 // pred_fallthru
          _
        // Predicated region
        $region25: #{bert_self_output_forward.1} parent=11 // pred_check
          %p201 = pneg %p151
        $region26: #{bert_self_output_forward.1} parent=11 // pred_check_branch
          %203 = sbr.rel (%p201) target = $region28
        $region27: #{bert_self_output_forward.1} parent=11 // pred_region
          _
        $region28: #{bert_self_output_forward.1} parent=11 // pred_fallthru
          _
      $region12: #{bert_self_output_forward.1} parent=5 // pred_fallthru
        _
      %p204 = scmp.lt.s32.totalorder %s15, 2
      // Predicated region
      $region29: #{bert_self_output_forward.1} parent=5 // pred_check
        %p205 = pneg %p204
      $region30: #{bert_self_output_forward.1} parent=5 // pred_check_branch
        %207 = sbr.rel (%p205) target = $region32
      $region31: #{bert_self_output_forward.1} parent=5 // pred_region
        // Predicated region
        $region33: #{bert_self_output_forward.1} parent=31 // pred_check
          %p208 = pneg %p35
        $region34: #{bert_self_output_forward.1} parent=31 // pred_check_branch
          %210 = sbr.rel (%p208) target = $region36
        $region35: #{bert_self_output_forward.1} parent=31 // pred_region
          %p211 = scmp.lt.s32.totalorder %s15, 1
          %s212 = scalar_select %p211, %s15, 1
          %s213 = smul.addr %s212, 8
          %s214 = scalar_lea.vmem %s0, %s213
        $region36: #{bert_self_output_forward.1} parent=31 // pred_fallthru
          _
        // Predicated region
        $region37: #{bert_self_output_forward.1} parent=31 // pred_check
          %p215 = pneg %p61
        $region38: #{bert_self_output_forward.1} parent=31 // pred_check_branch
          %217 = sbr.rel (%p215) target = $region40
        $region39: #{bert_self_output_forward.1} parent=31 // pred_region
          %p218 = scmp.lt.s32.totalorder %s15, 1
          %s219 = scalar_select %p218, %s15, 1
          %s220 = smul.addr %s219, 8
          %s221 = scalar_lea.vmem %s1, %s220
        $region40: #{bert_self_output_forward.1} parent=31 // pred_fallthru
          _
      $region32: #{bert_self_output_forward.1} parent=5 // pred_fallthru
        _
      %p222 = scmp.le.s32.totalorder 1, %s15
      %p223 = scmp.lt.s32.totalorder %s15, 3
      %p224 = pnand %p222, %p223
      %p225 = pneg %p224
      // Predicated region
      $region41: #{bert_self_output_forward.1} parent=5 // pred_check
        _
      $region42: #{bert_self_output_forward.1} parent=5 // pred_check_branch
        %227 = sbr.rel (%p224) target = $region44
      $region43: #{bert_self_output_forward.1} parent=5 // pred_region
        %s228 = ssub.s32 %s15, 1
        %p229 = scmp.lt.s32.totalorder %s20, 1
        %s230 = scalar_select %p229, %s20, 1
        %s231 = smul.addr %s230, 8
        %s232 = scalar_lea.vmem %s0, %s231
        %p233 = pneg %p41
        %p234 = pneg %p38
        %p235 = scmp.lt.s32.totalorder %s20, 1
        %s236 = scalar_select %p235, %s20, 1
        %s237 = smul.addr %s236, 8
        %s238 = scalar_lea.vmem %s1, %s237
        %p239 = pneg %p67
        %p240 = pneg %p64
        %p241 = pneg %p88
        %p242 = pneg %p85
        %p243 = pneg %p109
        %p244 = pneg %p106
        %p245 = pneg %p130
        %p246 = pneg %p127
        %p247 = pneg %p151
        %p248 = pneg %p148
        %p249 = pneg %p177
        %p250 = pneg %p174
        %s251 = sand.u32 %s164, 1
        %s252 = scalar_lea.sflag [#allocation3], %s251
        %s253 = sand.u32 %s164, 1
        %s254 = smul.addr %s253, 8
        %s255 = scalar_lea.vmem [#allocation2], %s254
        %p256 = scmp.lt.s32.totalorder %s20, 1
        %s257 = scalar_select %p256, %s20, 1
        %s258 = smul.addr %s257, 8
        %s259 = scalar_lea.vmem %s0, %s258
        %p260 = scmp.lt.s32.totalorder %s20, 1
        %s261 = scalar_select %p260, %s20, 1
        %s262 = smul.addr %s261, 8
        %s263 = scalar_lea.vmem %s1, %s262
        %v264 = vld [vmem:[%s259] sm:$0xff]
        %v265 = vpack.c.bf16 %v264, %v264
        %v266 = vld [vmem:[%s2] sm:$0xf]
        %v267 = vld [vmem:[%s2 + $0x4] sm:$0xf]
        %v268 = vld [vmem:[%s2 + $0x8] sm:$0xf]
        %v269 = vld [vmem:[%s2 + $0xc] sm:$0xf]
        %v270 = vld [vmem:[%s2 + $0x10] sm:$0xf]
        %v271 = vld [vmem:[%s2 + $0x14] sm:$0xf]
        %v272 = vld [vmem:[%s2 + $0x18] sm:$0xf]
        %v273 = vld [vmem:[%s2 + $0x1c] sm:$0xf]
        %v274 = vld [vmem:[%s2 + $0x20] sm:$0xf]
        %v275 = vld [vmem:[%s2 + $0x24] sm:$0xf]
        %v276 = vld [vmem:[%s2 + $0x28] sm:$0xf]
        %v277 = vld [vmem:[%s2 + $0x2c] sm:$0xf]
        %v278 = vld [vmem:[%s2 + $0x30] sm:$0xf]
        %v279 = vld [vmem:[%s2 + $0x34] sm:$0xf]
        %v280 = vld [vmem:[%s2 + $0x38] sm:$0xf]
        %v281 = vld [vmem:[%s2 + $0x3c] sm:$0xf]
        %v282 = vld [vmem:[%s3] sm:$0x1]
        %v284 = vperm.slane %v282, 0
        %v302 = vunpack.c.l.b16 %v266
        %v303 = vunpack.c.l.b16 %v267
        %v304 = vunpack.c.l.b16 %v268
        %v305 = vunpack.c.l.b16 %v269
        %v306 = vunpack.c.l.b16 %v270
        %v307 = vunpack.c.l.b16 %v271
        %v308 = vunpack.c.l.b16 %v272
        %v309 = vunpack.c.l.b16 %v273
        %v310 = vunpack.c.l.b16 %v274
        %v311 = vunpack.c.l.b16 %v275
        %v312 = vunpack.c.l.b16 %v276
        %v313 = vunpack.c.l.b16 %v277
        %v314 = vunpack.c.l.b16 %v278
        %v315 = vunpack.c.l.b16 %v279
        %v316 = vunpack.c.l.b16 %v280
        %v317 = vunpack.c.l.b16 %v281
        %v318 = vpack.c.b16 %v303, %v302
        %v319 = vpack.c.b16 %v305, %v304
        %v320 = vpack.c.b16 %v307, %v306
        %v321 = vpack.c.b16 %v309, %v308
        %v322 = vpack.c.b16 %v311, %v310
        %v323 = vpack.c.b16 %v313, %v312
        %v324 = vpack.c.b16 %v315, %v314
        %v325 = vpack.c.b16 %v317, %v316
        %334 = vmatpush.bf16.msra.mxu0 %v325
        %335 = vmatpush.bf16.msra.mxu0 %v324
        %336 = vmatpush.bf16.msra.mxu0 %v323
        %337 = vmatpush.bf16.msra.mxu0 %v322
        %338 = vmatpush.bf16.msra.mxu0 %v321
        %339 = vmatpush.bf16.msra.mxu0 %v320
        %340 = vmatpush.bf16.msra.mxu0 %v319
        %341 = vmatpush.bf16.msra.mxu0 %v318
        %342 = vmatmul.bf16.gmra.mxu0 %v265
        %v343 = vpop.f32.mrf.mxu0
        %v344 = vadd.f32 %v284, %v343
        %v345 = vpop.f32.mrf.mxu0
        %346 = vdwg.mxu0
        %v347 = vld [vmem:[%s263] sm:$0xff]
        %v348 = vadd.f32 %v344, %v347
        %349 = vadd.xlane.f32.xlu0 %v348
        %v350 = vpop.xlane.xlu0 %349
        %v351 = vrcp.pop 128.0
        %v352 = vmul.f32 128.0, %v351
        %v353 = vsub.f32 1.0, %v352
        %v354 = vmul.f32 %v351, %v353
        %v355 = vadd.f32 %v351, %v354
        %vm356 = vweird.f32 %v351
        %v357 = vsel %vm356, %v351, %v355
        %v358 = vmul.f32 %v350, %v357
        %v359 = vsub.f32 %v348, %v358
        %v360 = vmul.f32 %v359, %v359
        %361 = vadd.xlane.f32.xlu0 %v360
        %v362 = vpop.xlane.xlu0 %361
        %v363 = vmul.f32 %v362, %v357
        %v364 = vadd.f32 %v363, 1e-12
        %v365 = vrsqrt.pop %v364
        %v366 = vmul.f32 %v365, %v364
        %v367 = vmul.f32 %v366, %v365
        %v368 = vmul.f32 0.5, %v367
        %v369 = vsub.f32 1.5, %v368
        %v370 = vmul.f32 %v365, %v369
        %vm371 = vweird.f32 %v364
        %vm372 = vweird.f32 %v365
        %vm373 = vmor %vm371, %vm372
        %v374 = vsel %vm373, %v365, %v370
        %v375 = vmul.f32 %v359, %v374
        %v376 = vld [vmem:[%s4] sm:$0x1]
        %v378 = vperm.slane %v376, 0
        %v380 = vmul.f32 %v375, %v378
        %v381 = vld [vmem:[%s5] sm:$0x1]
        %v383 = vperm.slane %v381, 0
        %v385 = vadd.f32 %v380, %v383
        %386 = vst [vmem:[%s255] sm:$0xff] %v385
        %s387 = sand.u32 %s164, 1
        %s388 = scalar_lea.sflag [#allocation3], %s387
        %s389 = sand.u32 %s164, 1
        %s390 = smul.addr %s389, 8
        %s391 = scalar_lea.vmem [#allocation2], %s390
        // Predicated region
        $region45: #{bert_self_output_forward.1} parent=43 // pred_check
          %p392 = pneg %p174
        $region46: #{bert_self_output_forward.1} parent=43 // pred_check_branch
          %394 = sbr.rel (%p392) target = $region48
        $region47: #{bert_self_output_forward.1} parent=43 // pred_region
          %396 = vsyncadd %s388, 0
          %s397 = smul.addr %s20, 8
          %s398 = scalar_lea.hbm %s6, %s397
          %s400 = sshll.u32 %s391, 4
          %s401 = int_to_ptr.vmem [resolvable:$true] %s400
          %s402 = sshll.u32 %s398, 4
          %s403 = int_to_ptr.hbm [resolvable:$true] %s402
          %405 = dma.vmem_to_hbm [thread:$0]  %s401, 128, %s403, %s388
        $region48: #{bert_self_output_forward.1} parent=43 // pred_fallthru
          _
      $region44: #{bert_self_output_forward.1} parent=5 // pred_fallthru
        _
      %p406 = scmp.le.s32.totalorder 2, %s15
      // Predicated region
      $region49: #{bert_self_output_forward.1} parent=5 // pred_check
        %p407 = pneg %p406
      $region50: #{bert_self_output_forward.1} parent=5 // pred_check_branch
        %409 = sbr.rel (%p407) target = $region52
      $region51: #{bert_self_output_forward.1} parent=5 // pred_region
        %s410 = ssub.s32 %s15, 2
        // Predicated region
        $region53: #{bert_self_output_forward.1} parent=51 // pred_check
          %p411 = pneg %p180
        $region54: #{bert_self_output_forward.1} parent=51 // pred_check_branch
          %413 = sbr.rel (%p411) target = $region56
        $region55: #{bert_self_output_forward.1} parent=51 // pred_region
          %s414 = sand.u32 %s165, 1
          %s415 = scalar_lea.sflag [#allocation3], %s414
          %s416 = sand.u32 %s165, 1
          %s417 = smul.addr %s416, 8
          %s418 = scalar_lea.vmem [#allocation2], %s417
          %420 = dma.done %s415, 128
        $region56: #{bert_self_output_forward.1} parent=51 // pred_fallthru
          _
      $region52: #{bert_self_output_forward.1} parent=5 // pred_fallthru
        _
    $region6: #{bert_self_output_forward.1} parent=1 // loop_footer
      %s19 = sadd.s32 1, %s15
    $region7: #{bert_self_output_forward.1} parent=1 // loop_footer_branch
      %14 = sbr.rel target = $region3
    $region8: #{bert_self_output_forward.1} parent=1 // loop_exit
      _
    %421 = vsyncpa [#allocation3], 1
    %s422 = scalar_lea.sflag [#allocation3], 1
    %423 = vsyncpa %s422, 1

</llo_original>
